<compile_context>
chip_gen: v7x
topology: tpu7x:2x2x1
jax: 0.10.0
libtpu: 0.0.40
codegen_flags: <defaults>
</compile_context>

<pallas_src>
import jax
import jax.numpy as jnp
import numpy as np
from jax.experimental import pallas as pl
from jax.experimental.pallas import tpu as pltpu


def _round_up(x, m):
    return (x + m - 1) // m * m


def _pick_tile(n_nodes, cap):
    """Lane-aligned (128) node-axis tile, capped at `cap`.

    If the whole (128-rounded) axis fits in one tile, split it in two so the
    phase where this axis is the leading "parallel" grid dim can keep both of
    v7x's TensorCores busy.
    """
    n128 = _round_up(max(int(n_nodes), 1), 128)
    if n128 <= cap:
        if n128 > 128:
            return _round_up(-(-n128 // 2), 128)
        return n128
    return cap


def _make_rst_kernel(alpha, linear_transform):
    """Phase 1: forward aggregation onto dst nodes (feature-major).

    grid = (dst_tiles [parallel], src_tiles [reduction, trailing]).
    acc (64, td) accumulates feat_src^T @ A over src tiles; at the last src
    tile the folded linear transform, the alpha add and the dst-degree norm
    are applied and the lane-dense (64, td) block is stored.
    """
    has_fd = alpha != 0.0

    def kernel(*refs):
        it = iter(refs)
        a_ref = next(it)                                   # (ts, td) bf16
        fsT_ref = next(it)                                 # (64, ts) bf16
        fdT_ref = next(it) if has_fd else None             # (64, td) f32
        ndst_ref = next(it)                                # (1, td)  f32
        w21_ref = next(it) if linear_transform else None   # (64, 64) f32
        wd_ref = next(it) if (linear_transform and has_fd) else None
        rstT_ref = next(it)                                # (64, td) f32 out
        acc_ref = next(it)                                 # (64, td) f32 scratch

        k = pl.program_id(1)

        @pl.when(k == 0)
        def _():
            acc_ref[...] = jnp.zeros_like(acc_ref)

        # bf16 x bf16 MXU matmul, f32 accumulation — no in-kernel upcast of A.
        acc_ref[...] += jnp.dot(fsT_ref[...], a_ref[...],
                                preferred_element_type=jnp.float32)

        @pl.when(k == pl.num_programs(1) - 1)
        def _():
            acc = acc_ref[...]                             # (64, td) = fs^T A
            if linear_transform:
                # node-major (A^T fs) W1^T W2^T  ==  feature-major (W2 W1) @ acc
                acc = jnp.dot(w21_ref[...], acc,
                              preferred_element_type=jnp.float32)
            if has_fd:
                # pretrained_feature is None -> rst = rst + alpha * feat_dst
                fdT = fdT_ref[...]
                if linear_transform:
                    fdT = jnp.dot(wd_ref[...], fdT,
                                  preferred_element_type=jnp.float32)
                acc = acc + alpha * fdT
            rstT_ref[...] = acc * ndst_ref[...]

    return kernel


def _bsrc_kernel(at_ref, rstT_ref, nsrc_ref, bsrcT_ref, acc_ref):
    """Phase 2: backward aggregation onto src nodes (feature-major).

    grid = (src_tiles [parallel], dst_tiles [reduction, trailing]).
    acc (64, ts) accumulates rst^T @ A^T over dst tiles.
    """
    k = pl.program_id(1)

    @pl.when(k == 0)
    def _():
        acc_ref[...] = jnp.zeros_like(acc_ref)

    acc_ref[...] += jnp.dot(rstT_ref[...], at_ref[...],
                            preferred_element_type=jnp.float32)

    @pl.when(k == pl.num_programs(1) - 1)
    def _():
        bsrcT_ref[...] = acc_ref[...] * nsrc_ref[...]


def hgcn_layer(A, feat_src, feat_dst, w_linear, w_linear_2, *,
               alpha=0.0, norm_2=-1.0, linear_transform=False,
               tile_src=2048, tile_dst=1024):
    """Pallas implementation of HGCNLayer.forward (dense-adjacency form).

    Returns (bsrc, rst) matching the PyTorch module's return tuple, node-major.
    """
    A = jnp.asarray(A)
    feat_src = jnp.asarray(feat_src, dtype=jnp.float32)
    feat_dst = jnp.asarray(feat_dst, dtype=jnp.float32)
    n_src, n_dst = A.shape
    d = feat_src.shape[-1]

    # --- degree norms: fused O(N_src*N_dst) reduces, no f32 copy of A ------
    deg_dst = jnp.maximum(jnp.sum(A, axis=0, dtype=jnp.float32), 1.0)
    deg_src = jnp.maximum(jnp.sum(A, axis=1, dtype=jnp.float32), 1.0)
    norm_dst = (1.0 / deg_dst)[None, :]                    # (1, n_dst)
    norm_src = jnp.power(deg_src, norm_2)[None, :]         # (1, n_src)

    # --- tiles & lane/sublane-friendly padding -----------------------------
    ts = _pick_tile(n_src, tile_src)
    td = _pick_tile(n_dst, tile_dst)
    n_src_p = _round_up(n_src, ts)
    n_dst_p = _round_up(n_dst, td)

    # adjacency is 0/1 -> exact in bf16; pre-transposed copy for phase 2 so
    # both phases are plain jnp.dot (no transposed-contraction lowering).
    a_p = jnp.pad(A.astype(jnp.bfloat16),
                  ((0, n_src_p - n_src), (0, n_dst_p - n_dst)))
    at_p = a_p.T                                           # (n_dst_p, n_src_p)

    # feature-major, bf16-streamed feat_src (accumulation stays f32)
    fsT_p = jnp.pad(feat_src.T.astype(jnp.bfloat16),
                    ((0, 0), (0, n_src_p - n_src)))
    ndst_p = jnp.pad(norm_dst, ((0, 0), (0, n_dst_p - n_dst)),
                     constant_values=1.0)
    nsrc_p = jnp.pad(norm_src, ((0, 0), (0, n_src_p - n_src)),
                     constant_values=1.0)

    cparams = pltpu.CompilerParams(
        dimension_semantics=("parallel", "arbitrary"),
        # double-buffered working set is ~10 MiB with the default tiles; keep
        # the explicit budget well under v7x's 64 MiB physical VMEM.
        vmem_limit_bytes=40 * 1024 * 1024,
    )

    has_fd = float(alpha) != 0.0

    # ---------------- phase 1: rst^T = f(feat_src^T @ A) -------------------
    inputs = [a_p, fsT_p]
    in_specs = [
        pl.BlockSpec((ts, td), lambda j, k: (k, j)),       # A  (src, dst)
        pl.BlockSpec((d, ts), lambda j, k: (0, k)),        # feat_src^T
    ]
    if has_fd:
        fdT_p = jnp.pad(feat_dst.T, ((0, 0), (0, n_dst_p - n_dst)))
        inputs.append(fdT_p)
        in_specs.append(pl.BlockSpec((d, td), lambda j, k: (0, j)))
    inputs.append(ndst_p)
    in_specs.append(pl.BlockSpec((1, td), lambda j, k: (0, j)))
    if linear_transform:
        w1 = jnp.asarray(w_linear, jnp.float32)
        w2 = jnp.asarray(w_linear_2, jnp.float32)
        inputs.append(w2 @ w1)                             # (W2 W1), f32
        in_specs.append(pl.BlockSpec((d, d), lambda j, k: (0, 0)))
        if has_fd:
            inputs.append(w2)                              # W2, f32
            in_specs.append(pl.BlockSpec((d, d), lambda j, k: (0, 0)))

    rstT_p = pl.pallas_call(
        _make_rst_kernel(float(alpha), bool(linear_transform)),
        out_shape=jax.ShapeDtypeStruct((d, n_dst_p), jnp.float32),
        grid=(n_dst_p // td, n_src_p // ts),
        in_specs=in_specs,
        out_specs=pl.BlockSpec((d, td), lambda j, k: (0, j)),
        scratch_shapes=[pltpu.VMEM((d, td), jnp.float32)],
        compiler_params=cparams,
    )(*inputs)

    # ---------------- phase 2: bsrc^T = (rst^T @ A^T) * norm_src -----------
    rstT_bf16 = rstT_p.astype(jnp.bfloat16)   # bf16 stream for the re-read operand
    bsrcT_p = pl.pallas_call(
        _bsrc_kernel,
        out_shape=jax.ShapeDtypeStruct((d, n_src_p), jnp.float32),
        grid=(n_src_p // ts, n_dst_p // td),
        in_specs=[
            pl.BlockSpec((td, ts), lambda i, k: (k, i)),   # A^T (dst, src)
            pl.BlockSpec((d, td), lambda i, k: (0, k)),    # rst^T
            pl.BlockSpec((1, ts), lambda i, k: (0, i)),    # norm_src
        ],
        out_specs=pl.BlockSpec((d, ts), lambda i, k: (0, i)),
        scratch_shapes=[pltpu.VMEM((d, ts), jnp.float32)],
        compiler_params=cparams,
    )(at_p, rstT_bf16, nsrc_p)

    # back to node-major, drop padding
    rst = rstT_p[:, :n_dst].T
    bsrc = bsrcT_p[:, :n_src].T
    return bsrc, rst


def _reference(A, feat_src, feat_dst, w_linear, w_linear_2, *,
               alpha, norm_2, linear_transform):
    """Pure-JAX f32 reference mirroring the PyTorch/DGL forward semantics."""
    A = A.astype(jnp.float32)
    fs, fd = feat_src, feat_dst
    if linear_transform:
        fs = fs @ w_linear.T
    rst = A.T @ fs
    deg_dst = jnp.maximum(jnp.sum(A, axis=0), 1.0)
    norm_dst = (deg_dst ** -1.0)[:, None]
    if alpha != 0.0:
        rst = rst + alpha * fd
    if linear_transform:
        rst = rst @ w_linear_2.T
    rst = rst * norm_dst
    bsrc = A @ rst
    deg_src = jnp.maximum(jnp.sum(A, axis=1), 1.0)
    norm_src = (deg_src ** norm_2)[:, None]
    bsrc = bsrc * norm_src
    return bsrc, rst


if __name__ == "__main__":
    N_SRC, N_DST, D = 64, 32, 64   # D=64 fixed by the module's Linear layers

    key = jax.random.PRNGKey(0)
    k_adj, k_src, k_dst, k_w1, k_w2 = jax.random.split(key, 5)

    # random bipartite incidence / adjacency, ~20% density
    A = (jax.random.uniform(k_adj, (N_SRC, N_DST)) < 0.2).astype(jnp.float32)
    feat_src = jax.random.normal(k_src, (N_SRC, D), dtype=jnp.float32)
    feat_dst = jax.random.normal(k_dst, (N_DST, D), dtype=jnp.float32)

    # deterministic parameter init (nn.Linear(64, 64, bias=False) x2)
    bound = 1.0 / np.sqrt(D)
    w_linear = jax.random.uniform(k_w1, (D, D), minval=-bound, maxval=bound,
                                  dtype=jnp.float32)
    w_linear_2 = jax.random.uniform(k_w2, (D, D), minval=-bound, maxval=bound,
                                    dtype=jnp.float32)

    configs = [
        dict(alpha=0.5, norm_2=-1.0, linear_transform=True),
        dict(alpha=0.0, norm_2=-0.5, linear_transform=False),
    ]

    for kwargs in configs:
        bsrc, rst = hgcn_layer(A, feat_src, feat_dst, w_linear, w_linear_2,
                               **kwargs)
        jax.block_until_ready((bsrc, rst))

        bsrc_ref, rst_ref = _reference(A, feat_src, feat_dst, w_linear,
                                       w_linear_2, **kwargs)
        # bf16 streaming of feat_src / rst (f32 accumulation) -> looser tolerances
        np.testing.assert_allclose(np.asarray(rst), np.asarray(rst_ref),
                                   rtol=2e-2, atol=2e-2)
        np.testing.assert_allclose(np.asarray(bsrc), np.asarray(bsrc_ref),
                                   rtol=2e-2, atol=2e-2)

    print("KERNEL_OK")
</pallas_src>

<mosaic_0001>
module attributes {stable_mosaic.version = 11 : i64} {
  func.func @kernel(%arg0: i32, %arg1: i32, %arg2: memref<128x128xbf16, #tpu.memory_space<vmem>>, %arg3: memref<64x128xbf16, #tpu.memory_space<vmem>>, %arg4: memref<64x128xf32, #tpu.memory_space<vmem>>, %arg5: memref<1x128xf32, #tpu.memory_space<vmem>>, %arg6: memref<64x64xf32, #tpu.memory_space<vmem>>, %arg7: memref<64x64xf32, #tpu.memory_space<vmem>>, %arg8: memref<64x128xf32, #tpu.memory_space<vmem>>, %arg9: memref<64x128xf32, #tpu.memory_space<vmem>>) attributes {dimension_semantics = [#tpu.dimension_semantics<parallel>, #tpu.dimension_semantics<arbitrary>], iteration_bounds = array<i64: 1, 1>, scalar_prefetch = 0 : i64, scratch_operands = 1 : i64, tpu.core_type = #tpu.core_type<tc>, window_params = [{transform_indices = @transform_0, window_bounds = array<i64: 128, 128>}, {transform_indices = @transform_1, window_bounds = array<i64: 64, 128>}, {transform_indices = @transform_2, window_bounds = array<i64: 64, 128>}, {transform_indices = @transform_3, window_bounds = array<i64: 1, 128>}, {pipeline_mode = #tpu.pipeline_mode<synchronous>, transform_indices = @transform_4, window_bounds = array<i64: 64, 64>}, {pipeline_mode = #tpu.pipeline_mode<synchronous>, transform_indices = @transform_5, window_bounds = array<i64: 64, 64>}, {transform_indices = @transform_6, window_bounds = array<i64: 64, 128>}]} {
    %c0_i32 = arith.constant 0 : i32
    %0 = arith.cmpi eq, %arg1, %c0_i32 : i32
    %1 = arith.extui %0 : i1 to i32
    %c0_i32_0 = arith.constant 0 : i32
    %2 = arith.cmpi ne, %1, %c0_i32_0 : i32
    scf.if %2 {
      %cst_10 = arith.constant 0.000000e+00 : f32
      %12 = vector.broadcast %cst_10 : f32 to vector<64x128xf32>
      %c0_11 = arith.constant 0 : index
      %c0_12 = arith.constant 0 : index
      %13 = vector.load %arg9[%c0_11, %c0_12] : memref<64x128xf32, #tpu.memory_space<vmem>>, vector<64x128xf32>
      tpu.vector_store %arg9[%c0_11, %c0_12], %12 {strides = array<i32>} : memref<64x128xf32, #tpu.memory_space<vmem>>, vector<64x128xf32>,
    } else {
    }
    %c0 = arith.constant 0 : index
    %c0_1 = arith.constant 0 : index
    %3 = vector.load %arg9[%c0, %c0_1] : memref<64x128xf32, #tpu.memory_space<vmem>>, vector<64x128xf32>
    %c0_2 = arith.constant 0 : index
    %c0_3 = arith.constant 0 : index
    %4 = vector.load %arg3[%c0_2, %c0_3] : memref<64x128xbf16, #tpu.memory_space<vmem>>, vector<64x128xbf16>
    %c0_4 = arith.constant 0 : index
    %c0_5 = arith.constant 0 : index
    %5 = vector.load %arg2[%c0_4, %c0_5] : memref<128x128xbf16, #tpu.memory_space<vmem>>, vector<128x128xbf16>
    %cst = arith.constant dense<0.000000e+00> : vector<64x128xf32>
    %6 = tpu.matmul %4, %5, %cst {dimension_numbers = #tpu.dot_dimension_numbers<[1], [0], [0], [1], [0, 0, 1, 1], [], []>} : vector<64x128xbf16>, vector<128x128xbf16>, vector<64x128xf32> -> vector<64x128xf32>
    %7 = arith.addf %3, %6 : vector<64x128xf32>
    %c0_6 = arith.constant 0 : index
    %c0_7 = arith.constant 0 : index
    %8 = vector.load %arg9[%c0_6, %c0_7] : memref<64x128xf32, #tpu.memory_space<vmem>>, vector<64x128xf32>
    tpu.vector_store %arg9[%c0_6, %c0_7], %7 {strides = array<i32>} : memref<64x128xf32, #tpu.memory_space<vmem>>, vector<64x128xf32>,
    %c0_i32_8 = arith.constant 0 : i32
    %9 = arith.cmpi eq, %arg1, %c0_i32_8 : i32
    %10 = arith.extui %9 : i1 to i32
    %c0_i32_9 = arith.constant 0 : i32
    %11 = arith.cmpi ne, %10, %c0_i32_9 : i32
    scf.if %11 {
      %c0_10 = arith.constant 0 : index
      %c0_11 = arith.constant 0 : index
      %12 = vector.load %arg9[%c0_10, %c0_11] : memref<64x128xf32, #tpu.memory_space<vmem>>, vector<64x128xf32>
      %c0_12 = arith.constant 0 : index
      %c0_13 = arith.constant 0 : index
      %13 = vector.load %arg6[%c0_12, %c0_13] : memref<64x64xf32, #tpu.memory_space<vmem>>, vector<64x64xf32>
      %cst_14 = arith.constant dense<0.000000e+00> : vector<64x128xf32>
      %14 = tpu.matmul %13, %12, %cst_14 {dimension_numbers = #tpu.dot_dimension_numbers<[1], [0], [0], [1], [0, 0, 1, 1], [], []>} : vector<64x64xf32>, vector<64x128xf32>, vector<64x128xf32> -> vector<64x128xf32>
      %c0_15 = arith.constant 0 : index
      %c0_16 = arith.constant 0 : index
      %15 = vector.load %arg4[%c0_15, %c0_16] : memref<64x128xf32, #tpu.memory_space<vmem>>, vector<64x128xf32>
      %c0_17 = arith.constant 0 : index
      %c0_18 = arith.constant 0 : index
      %16 = vector.load %arg7[%c0_17, %c0_18] : memref<64x64xf32, #tpu.memory_space<vmem>>, vector<64x64xf32>
      %cst_19 = arith.constant dense<0.000000e+00> : vector<64x128xf32>
      %17 = tpu.matmul %16, %15, %cst_19 {dimension_numbers = #tpu.dot_dimension_numbers<[1], [0], [0], [1], [0, 0, 1, 1], [], []>} : vector<64x64xf32>, vector<64x128xf32>, vector<64x128xf32> -> vector<64x128xf32>
      %cst_20 = arith.constant 5.000000e-01 : f32
      %18 = vector.broadcast %cst_20 : f32 to vector<64x128xf32>
      %19 = arith.mulf %18, %17 : vector<64x128xf32>
      %20 = arith.addf %14, %19 : vector<64x128xf32>
      %c0_21 = arith.constant 0 : index
      %c0_22 = arith.constant 0 : index
      %21 = vector.load %arg5[%c0_21, %c0_22] : memref<1x128xf32, #tpu.memory_space<vmem>>, vector<1x128xf32>
      %22 = vector.broadcast %21 : vector<1x128xf32> to vector<64x128xf32>
      %23 = arith.mulf %20, %22 : vector<64x128xf32>
      %c0_23 = arith.constant 0 : index
      %c0_24 = arith.constant 0 : index
      %24 = vector.load %arg8[%c0_23, %c0_24] : memref<64x128xf32, #tpu.memory_space<vmem>>, vector<64x128xf32>
      tpu.vector_store %arg8[%c0_23, %c0_24], %23 {strides = array<i32>} : memref<64x128xf32, #tpu.memory_space<vmem>>, vector<64x128xf32>,
    } else {
    }
    return
  }
  func.func @transform_0(%arg0: i32, %arg1: i32) -> (i32, i32) {
    %c0_i32 = arith.constant 0 : i32
    return %arg1, %arg0 : i32, i32
  }
  func.func @transform_1(%arg0: i32, %arg1: i32) -> (i32, i32) {
    %c0_i32 = arith.constant 0 : i32
    %c0_i32_0 = arith.constant 0 : i32
    return %c0_i32, %arg1 : i32, i32
  }
  func.func @transform_2(%arg0: i32, %arg1: i32) -> (i32, i32) {
    %c0_i32 = arith.constant 0 : i32
    %c0_i32_0 = arith.constant 0 : i32
    return %c0_i32, %arg0 : i32, i32
  }
  func.func @transform_3(%arg0: i32, %arg1: i32) -> (i32, i32) {
    %c0_i32 = arith.constant 0 : i32
    %c0_i32_0 = arith.constant 0 : i32
    return %c0_i32, %arg0 : i32, i32
  }
  func.func @transform_4(%arg0: i32, %arg1: i32) -> (i32, i32) {
    %c0_i32 = arith.constant 0 : i32
    %c0_i32_0 = arith.constant 0 : i32
    %c0_i32_1 = arith.constant 0 : i32
    return %c0_i32, %c0_i32_0 : i32, i32
  }
  func.func @transform_5(%arg0: i32, %arg1: i32) -> (i32, i32) {
    %c0_i32 = arith.constant 0 : i32
    %c0_i32_0 = arith.constant 0 : i32
    %c0_i32_1 = arith.constant 0 : i32
    return %c0_i32, %c0_i32_0 : i32, i32
  }
  func.func @transform_6(%arg0: i32, %arg1: i32) -> (i32, i32) {
    %c0_i32 = arith.constant 0 : i32
    %c0_i32_0 = arith.constant 0 : i32
    return %c0_i32, %arg0 : i32, i32
  }
}

</mosaic_0001>

<llo_original>
// kernel: tpu_custom_call.1
$region0: #{tpu_custom_call.1}
  #allocation0 [shape = 'u32[]', space=smem, size = 0x4, offset = 0x4, fixed_abs, tag = 'smem constant byte address 0x4 - core index']
  #allocation1 [shape = 'u32[144,128]{1,0:T(1,128)}', space=vmem, size = 0x12000, scoped, tag = 'internal scratch']
  #allocation2 [shape = 'f32[64,128]{1,0:T(8,128)}', space=vmem, size = 0x8000, scoped, tag = 'scratch operand']
  %s0 = inlined_call_operand.hbm [shape: bf16[128,128], index: 0, kind: input, shape index: {}]
  %s1 = inlined_call_operand.hbm [shape: bf16[64,128], index: 1, kind: input, shape index: {}]
  %s2 = inlined_call_operand.hbm [shape: f32[64,128], index: 2, kind: input, shape index: {}]
  %s3 = inlined_call_operand.vmem [shape: f32[1,128], index: 3, kind: input, shape index: {}]
  %s4 = inlined_call_operand.hbm [shape: f32[64,64], index: 4, kind: input, shape index: {}]
  %s5 = inlined_call_operand.hbm [shape: f32[64,64], index: 5, kind: input, shape index: {}]
  %s6 = inlined_call_operand.hbm [shape: f32[64,128], index: 6, kind: output, shape index: {}]
  %s7 = sld [smem:[#allocation0]]
  $region62: #{tpu_custom_call.1} parent=0
    _
  %s9 = ssub.s32 1, %s7
  %s10 = scalar_select 0, %s9, %s7
  $region1: #{tpu_custom_call.1} parent=0
    #allocation3 [shape = 'u8[32768]{0}', space=vmem, size = 0x8000, scoped, tag = 'input window, operand 0, single buffered']
    #allocation4 [shape = 's32[1]{0}', space=sflag, size = 0x4, scoped, tag = 'scoped memory for tpu_custom_call.1']
    #allocation5 [shape = 's32[1]{0}', space=sflag, size = 0x4, scoped, tag = 'scoped memory for tpu_custom_call.1']
    #allocation6 [shape = 'u8[16384]{0}', space=vmem, size = 0x4000, scoped, tag = 'input window, operand 1, single buffered']
    #allocation7 [shape = 's32[1]{0}', space=sflag, size = 0x4, scoped, tag = 'scoped memory for tpu_custom_call.1']
    #allocation8 [shape = 'u8[32768]{0}', space=vmem, size = 0x8000, scoped, tag = 'input window, operand 2, single buffered']
    #allocation9 [shape = 'u8[32768]{0}', space=vmem, size = 0x8000, scoped, tag = 'input window, operand 4, single buffered']
    #allocation10 [shape = 's32[1]{0}', space=sflag, size = 0x4, scoped, tag = 'scoped memory for tpu_custom_call.1']
    #allocation11 [shape = 'u8[32768]{0}', space=vmem, size = 0x8000, scoped, tag = 'input window, operand 5, single buffered']
    #allocation12 [shape = 'u8[32768]{0}', space=vmem, size = 0x8000, scoped, tag = 'output window, operand 0, single buffered']
    %11 = vsyncpa [#allocation4], 0
    %12 = vsyncpa [#allocation7], 0
    %13 = vsyncpa [#allocation10], 0
    %14 = vsyncpa [#allocation5], 0
    // Predicated region
    $region2: #{tpu_custom_call.1} parent=1 // pred_check
      _
    $region3: #{tpu_custom_call.1} parent=1 // pred_check_branch
      %16 = sbr.rel (0) target = $region5
    $region4: #{tpu_custom_call.1} parent=1 // pred_region
      %s18 = ssub.s32 1024, 1024
      %19 = vsyncadd [#allocation4], %s18
      %s20 = sshll.u32 [#allocation3], 4
      %s21 = int_to_ptr.vmem [resolvable:$true] %s20
      %26 = dma.hbm_to_vmem [thread:$0]  %s0, 1024, %s21, [#allocation4], 64, 64, 4
    $region5: #{tpu_custom_call.1} parent=1 // pred_fallthru
      _
    // Predicated region
    $region6: #{tpu_custom_call.1} parent=1 // pred_check
      _
    $region7: #{tpu_custom_call.1} parent=1 // pred_check_branch
      %28 = sbr.rel (0) target = $region9
    $region8: #{tpu_custom_call.1} parent=1 // pred_region
      %s30 = ssub.s32 512, 512
      %31 = vsyncadd [#allocation7], %s30
      %s32 = sshll.u32 [#allocation6], 4
      %s33 = int_to_ptr.vmem [resolvable:$true] %s32
      %38 = dma.hbm_to_vmem [thread:$0]  %s1, 512, %s33, [#allocation7], 64, 64, 4
    $region9: #{tpu_custom_call.1} parent=1 // pred_fallthru
      _
    // Predicated region
    $region10: #{tpu_custom_call.1} parent=1 // pred_check
      _
    $region11: #{tpu_custom_call.1} parent=1 // pred_check_branch
      %40 = sbr.rel (0) target = $region13
    $region12: #{tpu_custom_call.1} parent=1 // pred_region
      %s42 = ssub.s32 1024, 1024
      %43 = vsyncadd [#allocation7], %s42
      %s44 = sshll.u32 [#allocation8], 4
      %s45 = int_to_ptr.vmem [resolvable:$true] %s44
      %50 = dma.hbm_to_vmem [thread:$0]  %s2, 1024, %s45, [#allocation7], 128, 128, 8
    $region13: #{tpu_custom_call.1} parent=1 // pred_fallthru
      _
    // Predicated region
    $region14: #{tpu_custom_call.1} parent=1 // pred_check
      _
    $region15: #{tpu_custom_call.1} parent=1 // pred_check_branch
      %52 = sbr.rel (0) target = $region17
    $region16: #{tpu_custom_call.1} parent=1 // pred_region
      _
    $region17: #{tpu_custom_call.1} parent=1 // pred_fallthru
      _
    // Predicated region
    $region18: #{tpu_custom_call.1} parent=1 // pred_check
      _
    $region19: #{tpu_custom_call.1} parent=1 // pred_check_branch
      %54 = sbr.rel (0) target = $region21
    $region20: #{tpu_custom_call.1} parent=1 // pred_region
      %s56 = ssub.s32 1024, 1024
      %57 = vsyncadd [#allocation10], %s56
      %s58 = sshll.u32 [#allocation9], 4
      %s59 = int_to_ptr.vmem [resolvable:$true] %s58
      %64 = dma.hbm_to_vmem [thread:$0]  %s4, 1024, %s59, [#allocation10], 128, 128, 8
    $region21: #{tpu_custom_call.1} parent=1 // pred_fallthru
      _
    // Predicated region
    $region22: #{tpu_custom_call.1} parent=1 // pred_check
      _
    $region23: #{tpu_custom_call.1} parent=1 // pred_check_branch
      %66 = sbr.rel (0) target = $region25
    $region24: #{tpu_custom_call.1} parent=1 // pred_region
      %s68 = ssub.s32 1024, 1024
      %69 = vsyncadd [#allocation10], %s68
      %s70 = sshll.u32 [#allocation11], 4
      %s71 = int_to_ptr.vmem [resolvable:$true] %s70
      %76 = dma.hbm_to_vmem [thread:$0]  %s5, 1024, %s71, [#allocation10], 128, 128, 8
    $region25: #{tpu_custom_call.1} parent=1 // pred_fallthru
      _
    // Predicated region
    $region26: #{tpu_custom_call.1} parent=1 // pred_check
      _
    $region27: #{tpu_custom_call.1} parent=1 // pred_check_branch
      %78 = sbr.rel (0) target = $region29
    $region28: #{tpu_custom_call.1} parent=1 // pred_region
      %79 = dma.done [#allocation4], 1024
    $region29: #{tpu_custom_call.1} parent=1 // pred_fallthru
      _
    // Predicated region
    $region30: #{tpu_custom_call.1} parent=1 // pred_check
      _
    $region31: #{tpu_custom_call.1} parent=1 // pred_check_branch
      %81 = sbr.rel (0) target = $region33
    $region32: #{tpu_custom_call.1} parent=1 // pred_region
      %82 = dma.done [#allocation7], 512
    $region33: #{tpu_custom_call.1} parent=1 // pred_fallthru
      _
    // Predicated region
    $region34: #{tpu_custom_call.1} parent=1 // pred_check
      _
    $region35: #{tpu_custom_call.1} parent=1 // pred_check_branch
      %84 = sbr.rel (0) target = $region37
    $region36: #{tpu_custom_call.1} parent=1 // pred_region
      %85 = dma.done [#allocation7], 1024
    $region37: #{tpu_custom_call.1} parent=1 // pred_fallthru
      _
    // Predicated region
    $region38: #{tpu_custom_call.1} parent=1 // pred_check
      _
    $region39: #{tpu_custom_call.1} parent=1 // pred_check_branch
      %87 = sbr.rel (0) target = $region41
    $region40: #{tpu_custom_call.1} parent=1 // pred_region
      %88 = dma.done [#allocation10], 1024
    $region41: #{tpu_custom_call.1} parent=1 // pred_fallthru
      _
    // Predicated region
    $region42: #{tpu_custom_call.1} parent=1 // pred_check
      _
    $region43: #{tpu_custom_call.1} parent=1 // pred_check_branch
      %90 = sbr.rel (0) target = $region45
    $region44: #{tpu_custom_call.1} parent=1 // pred_region
      %91 = dma.done [#allocation10], 1024
    $region45: #{tpu_custom_call.1} parent=1 // pred_fallthru
      _
    %p93 = scmp.eq.s32.totalorder 0, 0
    // Predicated region
    $region46: #{tpu_custom_call.1} parent=1 // pred_check
      %p94 = pneg %p93
    $region47: #{tpu_custom_call.1} parent=1 // pred_check_branch
      %96 = sbr.rel (%p94) target = $region49
    $region48: #{tpu_custom_call.1} parent=1 // pred_region
      %97 = vst [vmem:[#allocation2] sm:$0xff] 0.0
      %98 = vst [vmem:[#allocation2 + $0x8] sm:$0xff] 0.0
      %99 = vst [vmem:[#allocation2 + $0x10] sm:$0xff] 0.0
      %100 = vst [vmem:[#allocation2 + $0x18] sm:$0xff] 0.0
      %101 = vst [vmem:[#allocation2 + $0x20] sm:$0xff] 0.0
      %102 = vst [vmem:[#allocation2 + $0x28] sm:$0xff] 0.0
      %103 = vst [vmem:[#allocation2 + $0x30] sm:$0xff] 0.0
      %104 = vst [vmem:[#allocation2 + $0x38] sm:$0xff] 0.0
    $region49: #{tpu_custom_call.1} parent=1 // pred_fallthru
      _
    %v105 = vld [vmem:[#allocation2] sm:$0xff]
    %v106 = vld [vmem:[#allocation2 + $0x8] sm:$0xff]
    %v107 = vld [vmem:[#allocation2 + $0x10] sm:$0xff]
    %v108 = vld [vmem:[#allocation2 + $0x18] sm:$0xff]
    %v109 = vld [vmem:[#allocation2 + $0x20] sm:$0xff]
    %v110 = vld [vmem:[#allocation2 + $0x28] sm:$0xff]
    %v111 = vld [vmem:[#allocation2 + $0x30] sm:$0xff]
    %v112 = vld [vmem:[#allocation2 + $0x38] sm:$0xff]
    %v113 = vld [vmem:[#allocation6] sm:$0xf]
    %v114 = vld [vmem:[#allocation6 + $0x4] sm:$0xf]
    %v115 = vld [vmem:[#allocation6 + $0x8] sm:$0xf]
    %v116 = vld [vmem:[#allocation6 + $0xc] sm:$0xf]
    %v117 = vld [vmem:[#allocation6 + $0x10] sm:$0xf]
    %v118 = vld [vmem:[#allocation6 + $0x14] sm:$0xf]
    %v119 = vld [vmem:[#allocation6 + $0x18] sm:$0xf]
    %v120 = vld [vmem:[#allocation6 + $0x1c] sm:$0xf]
    %v121 = vld [vmem:[#allocation3] sm:$0xf]
    %v122 = vld [vmem:[#allocation3 + $0x4] sm:$0xf]
    %v123 = vld [vmem:[#allocation3 + $0x8] sm:$0xf]
    %v124 = vld [vmem:[#allocation3 + $0xc] sm:$0xf]
    %v125 = vld [vmem:[#allocation3 + $0x10] sm:$0xf]
    %v126 = vld [vmem:[#allocation3 + $0x14] sm:$0xf]
    %v127 = vld [vmem:[#allocation3 + $0x18] sm:$0xf]
    %v128 = vld [vmem:[#allocation3 + $0x1c] sm:$0xf]
    %v129 = vld [vmem:[#allocation3 + $0x20] sm:$0xf]
    %v130 = vld [vmem:[#allocation3 + $0x24] sm:$0xf]
    %v131 = vld [vmem:[#allocation3 + $0x28] sm:$0xf]
    %v132 = vld [vmem:[#allocation3 + $0x2c] sm:$0xf]
    %v133 = vld [vmem:[#allocation3 + $0x30] sm:$0xf]
    %v134 = vld [vmem:[#allocation3 + $0x34] sm:$0xf]
    %v135 = vld [vmem:[#allocation3 + $0x38] sm:$0xf]
    %v136 = vld [vmem:[#allocation3 + $0x3c] sm:$0xf]
    %v145 = vunpack.c.l.b16 %v113
    %v146 = vunpack.c.l.b16 %v114
    %v147 = vunpack.c.l.b16 %v115
    %v148 = vunpack.c.l.b16 %v116
    %v149 = vunpack.c.l.b16 %v117
    %v150 = vunpack.c.l.b16 %v118
    %v151 = vunpack.c.l.b16 %v119
    %v152 = vunpack.c.l.b16 %v120
    %v153 = vpack.c.b16 %v146, %v145
    %v154 = vpack.c.b16 %v148, %v147
    %v155 = vpack.c.b16 %v150, %v149
    %v156 = vpack.c.b16 %v152, %v151
    %v177 = vunpack.c.l.b16 %v121
    %v178 = vunpack.c.l.b16 %v122
    %v179 = vunpack.c.l.b16 %v123
    %v180 = vunpack.c.l.b16 %v124
    %v181 = vunpack.c.l.b16 %v125
    %v182 = vunpack.c.l.b16 %v126
    %v183 = vunpack.c.l.b16 %v127
    %v184 = vunpack.c.l.b16 %v128
    %v185 = vunpack.c.l.b16 %v129
    %v186 = vunpack.c.l.b16 %v130
    %v187 = vunpack.c.l.b16 %v131
    %v188 = vunpack.c.l.b16 %v132
    %v189 = vunpack.c.l.b16 %v133
    %v190 = vunpack.c.l.b16 %v134
    %v191 = vunpack.c.l.b16 %v135
    %v192 = vunpack.c.l.b16 %v136
    %v193 = vpack.c.b16 %v178, %v177
    %v194 = vpack.c.b16 %v180, %v179
    %v195 = vpack.c.b16 %v182, %v181
    %v196 = vpack.c.b16 %v184, %v183
    %v197 = vpack.c.b16 %v186, %v185
    %v198 = vpack.c.b16 %v188, %v187
    %v199 = vpack.c.b16 %v190, %v189
    %v200 = vpack.c.b16 %v192, %v191
    %209 = vmatprep.subr.bf16.mxu0 0
    %210 = vmatpush1.bf16.msra.mxu0 %v193
    %211 = vmatprep.subr.bf16.mxu0 0
    %212 = vmatpush1.bf16.msra.mxu0 %v194
    %213 = vmatprep.subr.bf16.mxu0 0
    %214 = vmatpush1.bf16.msra.mxu0 %v195
    %215 = vmatprep.subr.bf16.mxu0 0
    %216 = vmatpush1.bf16.msra.mxu0 %v196
    %217 = vmatprep.subr.bf16.mxu0 0
    %218 = vmatpush1.bf16.msra.mxu0 %v197
    %219 = vmatprep.subr.bf16.mxu0 0
    %220 = vmatpush1.bf16.msra.mxu0 %v198
    %221 = vmatprep.subr.bf16.mxu0 0
    %222 = vmatpush1.bf16.msra.mxu0 %v199
    %223 = vmatprep.subr.bf16.mxu0 0
    %224 = vmatpush1.bf16.msra.mxu0 %v200
    %225 = vmatprep.subr.bf16.mxu0 0
    %226 = vmatpush1.bf16.msra.mxu0 0
    %227 = vmatprep.subr.bf16.mxu0 0
    %228 = vmatpush1.bf16.msra.mxu0 0
    %229 = vmatprep.subr.bf16.mxu0 0
    %230 = vmatpush1.bf16.msra.mxu0 0
    %231 = vmatprep.subr.bf16.mxu0 0
    %232 = vmatpush1.bf16.msra.mxu0 0
    %233 = vmatprep.subr.bf16.mxu0 0
    %234 = vmatpush1.bf16.msra.mxu0 0
    %235 = vmatprep.subr.bf16.mxu0 0
    %236 = vmatpush1.bf16.msra.mxu0 0
    %237 = vmatprep.subr.bf16.mxu0 0
    %238 = vmatpush1.bf16.msra.mxu0 0
    %239 = vmatprep.subr.bf16.mxu0 0
    %240 = vmatpush1.bf16.msra.mxu0 0
    %241 = vmatprep.mubr.bf16.mxu0 0
    %242 = vmatmul.mubr.bf16.gmra.mrb[0].mxu0 %v153
    %v243 = vpop.f32.mrb[0].mxu0
    %v244 = vadd.f32 0.0, %v243
    %v245 = vpop.f32.mrb[0].mxu0
    %v246 = vpop.f32.mrb[0].mxu0
    %v247 = vadd.f32 0.0, %v246
    %v248 = vpop.f32.mrb[0].mxu0
    %249 = vmatprep.mubr.bf16.mxu0 0
    %250 = vmatmul.mubr.bf16.gmra.mrb[0].mxu0 %v154
    %v251 = vpop.f32.mrb[0].mxu0
    %v252 = vadd.f32 0.0, %v251
    %v253 = vpop.f32.mrb[0].mxu0
    %v254 = vpop.f32.mrb[0].mxu0
    %v255 = vadd.f32 0.0, %v254
    %v256 = vpop.f32.mrb[0].mxu0
    %257 = vmatprep.mubr.bf16.mxu0 0
    %258 = vmatmul.mubr.bf16.gmra.mrb[0].mxu0 %v155
    %v259 = vpop.f32.mrb[0].mxu0
    %v260 = vadd.f32 0.0, %v259
    %v261 = vpop.f32.mrb[0].mxu0
    %v262 = vpop.f32.mrb[0].mxu0
    %v263 = vadd.f32 0.0, %v262
    %v264 = vpop.f32.mrb[0].mxu0
    %265 = vmatprep.mubr.bf16.mxu0 0
    %266 = vmatmul.mubr.bf16.gmra.mrb[0].mxu0 %v156
    %v267 = vpop.f32.mrb[0].mxu0
    %v268 = vadd.f32 0.0, %v267
    %v269 = vpop.f32.mrb[0].mxu0
    %v270 = vpop.f32.mrb[0].mxu0
    %v271 = vadd.f32 0.0, %v270
    %v272 = vpop.f32.mrb[0].mxu0
    %273 = vdwg.mxu0
    %v274 = vadd.f32 %v105, %v244
    %v275 = vadd.f32 %v106, %v247
    %v276 = vadd.f32 %v107, %v252
    %v277 = vadd.f32 %v108, %v255
    %v278 = vadd.f32 %v109, %v260
    %v279 = vadd.f32 %v110, %v263
    %v280 = vadd.f32 %v111, %v268
    %v281 = vadd.f32 %v112, %v271
    %282 = vst [vmem:[#allocation2] sm:$0xff] %v274
    %283 = vst [vmem:[#allocation2 + $0x8] sm:$0xff] %v275
    %284 = vst [vmem:[#allocation2 + $0x10] sm:$0xff] %v276
    %285 = vst [vmem:[#allocation2 + $0x18] sm:$0xff] %v277
    %286 = vst [vmem:[#allocation2 + $0x20] sm:$0xff] %v278
    %287 = vst [vmem:[#allocation2 + $0x28] sm:$0xff] %v279
    %288 = vst [vmem:[#allocation2 + $0x30] sm:$0xff] %v280
    %289 = vst [vmem:[#allocation2 + $0x38] sm:$0xff] %v281
    // Predicated region
    $region50: #{tpu_custom_call.1} parent=1 // pred_check
      %p290 = pneg %p93
    $region51: #{tpu_custom_call.1} parent=1 // pred_check_branch
      %292 = sbr.rel (%p290) target = $region53
    $region52: #{tpu_custom_call.1} parent=1 // pred_region
      %v293 = vld [vmem:[#allocation2] sm:$0xff]
      %v294 = vld [vmem:[#allocation2 + $0x8] sm:$0xff]
      %v295 = vld [vmem:[#allocation2 + $0x10] sm:$0xff]
      %v296 = vld [vmem:[#allocation2 + $0x18] sm:$0xff]
      %v297 = vld [vmem:[#allocation2 + $0x20] sm:$0xff]
      %v298 = vld [vmem:[#allocation2 + $0x28] sm:$0xff]
      %v299 = vld [vmem:[#allocation2 + $0x30] sm:$0xff]
      %v300 = vld [vmem:[#allocation2 + $0x38] sm:$0xff]
      %v301 = vld [vmem:[#allocation9] sm:$0xff]
      %v302 = vld [vmem:[#allocation9 + $0x8] sm:$0xff]
      %v303 = vld [vmem:[#allocation9 + $0x10] sm:$0xff]
      %v304 = vld [vmem:[#allocation9 + $0x18] sm:$0xff]
      %v305 = vld [vmem:[#allocation9 + $0x20] sm:$0xff]
      %v306 = vld [vmem:[#allocation9 + $0x28] sm:$0xff]
      %v307 = vld [vmem:[#allocation9 + $0x30] sm:$0xff]
      %v308 = vld [vmem:[#allocation9 + $0x38] sm:$0xff]
      %v309 = vld [vmem:[#allocation8] sm:$0xff]
      %v310 = vld [vmem:[#allocation8 + $0x8] sm:$0xff]
      %v311 = vld [vmem:[#allocation8 + $0x10] sm:$0xff]
      %v312 = vld [vmem:[#allocation8 + $0x18] sm:$0xff]
      %v313 = vld [vmem:[#allocation8 + $0x20] sm:$0xff]
      %v314 = vld [vmem:[#allocation8 + $0x28] sm:$0xff]
      %v315 = vld [vmem:[#allocation8 + $0x30] sm:$0xff]
      %v316 = vld [vmem:[#allocation8 + $0x38] sm:$0xff]
      %v317 = vld [vmem:[#allocation11] sm:$0xff]
      %v318 = vld [vmem:[#allocation11 + $0x8] sm:$0xff]
      %v319 = vld [vmem:[#allocation11 + $0x10] sm:$0xff]
      %v320 = vld [vmem:[#allocation11 + $0x18] sm:$0xff]
      %v321 = vld [vmem:[#allocation11 + $0x20] sm:$0xff]
      %v322 = vld [vmem:[#allocation11 + $0x28] sm:$0xff]
      %v323 = vld [vmem:[#allocation11 + $0x30] sm:$0xff]
      %v324 = vld [vmem:[#allocation11 + $0x38] sm:$0xff]
      %vm325 = vcmask 523264
      %v327 = vsel %vm325, %v317, 0
      %v330 = vsel %vm325, %v318, 0
      %v333 = vsel %vm325, %v319, 0
      %v336 = vsel %vm325, %v320, 0
      %v339 = vsel %vm325, %v321, 0
      %v342 = vsel %vm325, %v322, 0
      %v345 = vsel %vm325, %v323, 0
      %v348 = vsel %vm325, %v324, 0
      %350 = vmatprep.subr.mxu0 0.0
      %351 = vmatpush1.msra.mxu0 %v309
      %352 = vmatprep.subr.mxu0 0.0
      %353 = vmatpush1.msra.mxu0 %v310
      %354 = vmatprep.subr.mxu0 0.0
      %355 = vmatpush1.msra.mxu0 %v311
      %356 = vmatprep.subr.mxu0 0.0
      %357 = vmatpush1.msra.mxu0 %v312
      %358 = vmatprep.subr.mxu0 0.0
      %359 = vmatpush1.msra.mxu0 %v313
      %360 = vmatprep.subr.mxu0 0.0
      %361 = vmatpush1.msra.mxu0 %v314
      %362 = vmatprep.subr.mxu0 0.0
      %363 = vmatpush1.msra.mxu0 %v315
      %364 = vmatprep.subr.mxu0 0.0
      %365 = vmatpush1.msra.mxu0 %v316
      %366 = vmatprep.subr.mxu0 0.0
      %367 = vmatpush1.msra.mxu0 0.0
      %368 = vmatprep.subr.mxu0 0.0
      %369 = vmatpush1.msra.mxu0 0.0
      %370 = vmatprep.subr.mxu0 0.0
      %371 = vmatpush1.msra.mxu0 0.0
      %372 = vmatprep.subr.mxu0 0.0
      %373 = vmatpush1.msra.mxu0 0.0
      %374 = vmatprep.subr.mxu0 0.0
      %375 = vmatpush1.msra.mxu0 0.0
      %376 = vmatprep.subr.mxu0 0.0
      %377 = vmatpush1.msra.mxu0 0.0
      %378 = vmatprep.subr.mxu0 0.0
      %379 = vmatpush1.msra.mxu0 0.0
      %380 = vmatprep.subr.mxu0 0.0
      %381 = vmatpush1.msra.mxu0 0.0
      %382 = vmatprep.subr.mxu0 0.0
      %383 = vmatpush1.msra.mxu0 0.0
      %384 = vmatprep.subr.mxu0 0.0
      %385 = vmatpush1.msra.mxu0 0.0
      %386 = vmatprep.subr.mxu0 0.0
      %387 = vmatpush1.msra.mxu0 0.0
      %388 = vmatprep.subr.mxu0 0.0
      %389 = vmatpush1.msra.mxu0 0.0
      %390 = vmatprep.subr.mxu0 0.0
      %391 = vmatpush1.msra.mxu0 0.0
      %392 = vmatprep.subr.mxu0 0.0
      %393 = vmatpush1.msra.mxu0 0.0
      %394 = vmatprep.subr.mxu0 0.0
      %395 = vmatpush1.msra.mxu0 0.0
      %396 = vmatprep.subr.mxu0 0.0
      %397 = vmatpush1.msra.mxu0 0.0
      %398 = vmatprep.subr.mxu0 0.0
      %399 = vmatpush1.msra.mxu0 0.0
      %400 = vmatprep.subr.mxu0 0.0
      %401 = vmatpush1.msra.mxu0 0.0
      %402 = vmatprep.subr.mxu0 0.0
      %403 = vmatpush1.msra.mxu0 0.0
      %404 = vmatprep.subr.mxu0 0.0
      %405 = vmatpush1.msra.mxu0 0.0
      %406 = vmatprep.subr.mxu0 0.0
      %407 = vmatpush1.msra.mxu0 0.0
      %408 = vmatprep.subr.mxu0 0.0
      %409 = vmatpush1.msra.mxu0 0.0
      %410 = vmatprep.subr.mxu0 0.0
      %411 = vmatpush1.msra.mxu0 0.0
      %412 = vmatprep.subr.mxu0 0.0
      %413 = vmatpush1.msra.mxu0 0.0
      %414 = vmatprep.mubr.f32.mxu0 0.0
      %415 = vmatmul.mubr.f32.gmra.mrb[0].mxu0 %v327
      %v416 = vpop.f32.mrb[0].mxu0
      %v417 = vadd.f32 0.0, %v416
      %v418 = vpop.f32.mrb[0].mxu0
      %419 = vmatprep.mubr.f32.mxu0 0.0
      %420 = vmatmul.mubr.f32.gmra.mrb[0].mxu0 %v330
      %v421 = vpop.f32.mrb[0].mxu0
      %v422 = vadd.f32 0.0, %v421
      %v423 = vpop.f32.mrb[0].mxu0
      %424 = vmatprep.mubr.f32.mxu0 0.0
      %425 = vmatmul.mubr.f32.gmra.mrb[0].mxu0 %v333
      %v426 = vpop.f32.mrb[0].mxu0
      %v427 = vadd.f32 0.0, %v426
      %v428 = vpop.f32.mrb[0].mxu0
      %429 = vmatprep.mubr.f32.mxu0 0.0
      %430 = vmatmul.mubr.f32.gmra.mrb[0].mxu0 %v336
      %v431 = vpop.f32.mrb[0].mxu0
      %v432 = vadd.f32 0.0, %v431
      %v433 = vpop.f32.mrb[0].mxu0
      %434 = vmatprep.mubr.f32.mxu0 0.0
      %435 = vmatmul.mubr.f32.gmra.mrb[0].mxu0 %v339
      %v436 = vpop.f32.mrb[0].mxu0
      %v437 = vadd.f32 0.0, %v436
      %v438 = vpop.f32.mrb[0].mxu0
      %439 = vmatprep.mubr.f32.mxu0 0.0
      %440 = vmatmul.mubr.f32.gmra.mrb[0].mxu0 %v342
      %v441 = vpop.f32.mrb[0].mxu0
      %v442 = vadd.f32 0.0, %v441
      %v443 = vpop.f32.mrb[0].mxu0
      %444 = vmatprep.mubr.f32.mxu0 0.0
      %445 = vmatmul.mubr.f32.gmra.mrb[0].mxu0 %v345
      %v446 = vpop.f32.mrb[0].mxu0
      %v447 = vadd.f32 0.0, %v446
      %v448 = vpop.f32.mrb[0].mxu0
      %449 = vmatprep.mubr.f32.mxu0 0.0
      %450 = vmatmul.mubr.f32.gmra.mrb[0].mxu0 %v348
      %v451 = vpop.f32.mrb[0].mxu0
      %v452 = vadd.f32 0.0, %v451
      %v453 = vpop.f32.mrb[0].mxu0
      %454 = vdwg.mxu0
      %v455 = vmul.f32 %v417, 0.5
      %v456 = vmul.f32 %v422, 0.5
      %v457 = vmul.f32 %v427, 0.5
      %v458 = vmul.f32 %v432, 0.5
      %v459 = vmul.f32 %v437, 0.5
      %v460 = vmul.f32 %v442, 0.5
      %v461 = vmul.f32 %v447, 0.5
      %v462 = vmul.f32 %v452, 0.5
      %v464 = vsel %vm325, %v301, 0
      %v467 = vsel %vm325, %v302, 0
      %v470 = vsel %vm325, %v303, 0
      %v473 = vsel %vm325, %v304, 0
      %v476 = vsel %vm325, %v305, 0
      %v479 = vsel %vm325, %v306, 0
      %v482 = vsel %vm325, %v307, 0
      %v485 = vsel %vm325, %v308, 0
      %487 = vmatprep.subr.mxu0 0.0
      %488 = vmatpush1.msra.mxu0 %v293
      %489 = vmatprep.subr.mxu0 0.0
      %490 = vmatpush1.msra.mxu0 %v294
      %491 = vmatprep.subr.mxu0 0.0
      %492 = vmatpush1.msra.mxu0 %v295
      %493 = vmatprep.subr.mxu0 0.0
      %494 = vmatpush1.msra.mxu0 %v296
      %495 = vmatprep.subr.mxu0 0.0
      %496 = vmatpush1.msra.mxu0 %v297
      %497 = vmatprep.subr.mxu0 0.0
      %498 = vmatpush1.msra.mxu0 %v298
      %499 = vmatprep.subr.mxu0 0.0
      %500 = vmatpush1.msra.mxu0 %v299
      %501 = vmatprep.subr.mxu0 0.0
      %502 = vmatpush1.msra.mxu0 %v300
      %503 = vmatprep.subr.mxu0 0.0
      %504 = vmatpush1.msra.mxu0 0.0
      %505 = vmatprep.subr.mxu0 0.0
      %506 = vmatpush1.msra.mxu0 0.0
      %507 = vmatprep.subr.mxu0 0.0
      %508 = vmatpush1.msra.mxu0 0.0
      %509 = vmatprep.subr.mxu0 0.0
      %510 = vmatpush1.msra.mxu0 0.0
      %511 = vmatprep.subr.mxu0 0.0
      %512 = vmatpush1.msra.mxu0 0.0
      %513 = vmatprep.subr.mxu0 0.0
      %514 = vmatpush1.msra.mxu0 0.0
      %515 = vmatprep.subr.mxu0 0.0
      %516 = vmatpush1.msra.mxu0 0.0
      %517 = vmatprep.subr.mxu0 0.0
      %518 = vmatpush1.msra.mxu0 0.0
      %519 = vmatprep.subr.mxu0 0.0
      %520 = vmatpush1.msra.mxu0 0.0
      %521 = vmatprep.subr.mxu0 0.0
      %522 = vmatpush1.msra.mxu0 0.0
      %523 = vmatprep.subr.mxu0 0.0
      %524 = vmatpush1.msra.mxu0 0.0
      %525 = vmatprep.subr.mxu0 0.0
      %526 = vmatpush1.msra.mxu0 0.0
      %527 = vmatprep.subr.mxu0 0.0
      %528 = vmatpush1.msra.mxu0 0.0
      %529 = vmatprep.subr.mxu0 0.0
      %530 = vmatpush1.msra.mxu0 0.0
      %531 = vmatprep.subr.mxu0 0.0
      %532 = vmatpush1.msra.mxu0 0.0
      %533 = vmatprep.subr.mxu0 0.0
      %534 = vmatpush1.msra.mxu0 0.0
      %535 = vmatprep.subr.mxu0 0.0
      %536 = vmatpush1.msra.mxu0 0.0
      %537 = vmatprep.subr.mxu0 0.0
      %538 = vmatpush1.msra.mxu0 0.0
      %539 = vmatprep.subr.mxu0 0.0
      %540 = vmatpush1.msra.mxu0 0.0
      %541 = vmatprep.subr.mxu0 0.0
      %542 = vmatpush1.msra.mxu0 0.0
      %543 = vmatprep.subr.mxu0 0.0
      %544 = vmatpush1.msra.mxu0 0.0
      %545 = vmatprep.subr.mxu0 0.0
      %546 = vmatpush1.msra.mxu0 0.0
      %547 = vmatprep.subr.mxu0 0.0
      %548 = vmatpush1.msra.mxu0 0.0
      %549 = vmatprep.subr.mxu0 0.0
      %550 = vmatpush1.msra.mxu0 0.0
      %551 = vmatprep.mubr.f32.mxu0 0.0
      %552 = vmatmul.mubr.f32.gmra.mrb[0].mxu0 %v464
      %v553 = vpop.f32.mrb[0].mxu0
      %v554 = vadd.f32 %v455, %v553
      %v555 = vpop.f32.mrb[0].mxu0
      %556 = vmatprep.mubr.f32.mxu0 0.0
      %557 = vmatmul.mubr.f32.gmra.mrb[0].mxu0 %v467
      %v558 = vpop.f32.mrb[0].mxu0
      %v559 = vadd.f32 %v456, %v558
      %v560 = vpop.f32.mrb[0].mxu0
      %561 = vmatprep.mubr.f32.mxu0 0.0
      %562 = vmatmul.mubr.f32.gmra.mrb[0].mxu0 %v470
      %v563 = vpop.f32.mrb[0].mxu0
      %v564 = vadd.f32 %v457, %v563
      %v565 = vpop.f32.mrb[0].mxu0
      %566 = vmatprep.mubr.f32.mxu0 0.0
      %567 = vmatmul.mubr.f32.gmra.mrb[0].mxu0 %v473
      %v568 = vpop.f32.mrb[0].mxu0
      %v569 = vadd.f32 %v458, %v568
      %v570 = vpop.f32.mrb[0].mxu0
      %571 = vmatprep.mubr.f32.mxu0 0.0
      %572 = vmatmul.mubr.f32.gmra.mrb[0].mxu0 %v476
      %v573 = vpop.f32.mrb[0].mxu0
      %v574 = vadd.f32 %v459, %v573
      %v575 = vpop.f32.mrb[0].mxu0
      %576 = vmatprep.mubr.f32.mxu0 0.0
      %577 = vmatmul.mubr.f32.gmra.mrb[0].mxu0 %v479
      %v578 = vpop.f32.mrb[0].mxu0
      %v579 = vadd.f32 %v460, %v578
      %v580 = vpop.f32.mrb[0].mxu0
      %581 = vmatprep.mubr.f32.mxu0 0.0
      %582 = vmatmul.mubr.f32.gmra.mrb[0].mxu0 %v482
      %v583 = vpop.f32.mrb[0].mxu0
      %v584 = vadd.f32 %v461, %v583
      %v585 = vpop.f32.mrb[0].mxu0
      %586 = vmatprep.mubr.f32.mxu0 0.0
      %587 = vmatmul.mubr.f32.gmra.mrb[0].mxu0 %v485
      %v588 = vpop.f32.mrb[0].mxu0
      %v589 = vadd.f32 %v462, %v588
      %v590 = vpop.f32.mrb[0].mxu0
      %591 = vdwg.mxu0
      %v592 = vld [vmem:[%s3] sm:$0x1]
      %v594 = vlaneseq
      %v595 = vshrl.u32 %v594, 7
      %v596 = vsub.s32 0, %v595
      %v597 = vrot.slane %v592, %v596
      %v599 = vmul.f32 %v554, %v597
      %v600 = vmul.f32 %v559, %v597
      %v601 = vmul.f32 %v564, %v597
      %v602 = vmul.f32 %v569, %v597
      %v603 = vmul.f32 %v574, %v597
      %v604 = vmul.f32 %v579, %v597
      %v605 = vmul.f32 %v584, %v597
      %v606 = vmul.f32 %v589, %v597
      %607 = vst [vmem:[#allocation12] sm:$0xff] %v599
      %608 = vst [vmem:[#allocation12 + $0x8] sm:$0xff] %v600
      %609 = vst [vmem:[#allocation12 + $0x10] sm:$0xff] %v601
      %610 = vst [vmem:[#allocation12 + $0x18] sm:$0xff] %v602
      %611 = vst [vmem:[#allocation12 + $0x20] sm:$0xff] %v603
      %612 = vst [vmem:[#allocation12 + $0x28] sm:$0xff] %v604
      %613 = vst [vmem:[#allocation12 + $0x30] sm:$0xff] %v605
      %614 = vst [vmem:[#allocation12 + $0x38] sm:$0xff] %v606
    $region53: #{tpu_custom_call.1} parent=1 // pred_fallthru
      _
    // Predicated region
    $region54: #{tpu_custom_call.1} parent=1 // pred_check
      _
    $region55: #{tpu_custom_call.1} parent=1 // pred_check_branch
      %616 = sbr.rel (0) target = $region57
    $region56: #{tpu_custom_call.1} parent=1 // pred_region
      %s618 = ssub.s32 1024, 1024
      %619 = vsyncadd [#allocation5], %s618
      %s620 = sshll.u32 [#allocation12], 4
      %s621 = int_to_ptr.vmem [resolvable:$true] %s620
      %626 = dma.vmem_to_hbm [thread:$0]  %s621, 1024, %s6, [#allocation5], 128, 128, 8
    $region57: #{tpu_custom_call.1} parent=1 // pred_fallthru
      _
    // Predicated region
    $region58: #{tpu_custom_call.1} parent=1 // pred_check
      _
    $region59: #{tpu_custom_call.1} parent=1 // pred_check_branch
      %628 = sbr.rel (0) target = $region61
    $region60: #{tpu_custom_call.1} parent=1 // pred_region
      %629 = dma.done [#allocation5], 1024
    $region61: #{tpu_custom_call.1} parent=1 // pred_fallthru
      _
    %630 = vsyncpa [#allocation4], 1
    %631 = vsyncpa [#allocation7], 1
    %632 = vsyncpa [#allocation10], 1
    %633 = vsyncpa [#allocation5], 1

</llo_original>
